<compile_context>
chip_gen: v7x
topology: tpu7x:2x2x1
jax: 0.10.0
libtpu: 0.0.40
codegen_flags: <defaults>
</compile_context>

<pallas_src>
from functools import partial

import jax
import jax.numpy as jnp
from jax.experimental import pallas as pl
from jax.experimental.pallas import tpu as pltpu

LANE = 128           # lane width: pad H / C / input features to this
SUBLANE_BF16 = 16    # bf16 native sublane tile: pad batch to a multiple of this
NUM_HIDDEN = 7       # number of hidden Linear+ReLU blocks after the first layer
NUM_LAYERS = NUM_HIDDEN + 2   # first + 7 hidden + logit = 9


def _bf16_vpu_available():
    """True on chips whose VPU has bf16 ALUs (v6e / v7x); False otherwise/failure."""
    try:
        kind = jax.devices()[0].device_kind.lower()
    except Exception:
        return False
    return ("v6" in kind) or ("v7" in kind) or ("7x" in kind)


# Static, resolved once at import time; the kernel is traced with this constant.
BF16_EPILOGUE = _bf16_vpu_available()
_EPILOGUE_DTYPE = jnp.bfloat16 if BF16_EPILOGUE else jnp.float32


def _vanilla_kernel(x_ref, w_ref, b_ref, out_ref, penulti_ref):
    """Full MLP forward on fully-resident VMEM operands.

    x_ref:       (Bp, 128) bf16      zero-padded input (Bp multiple of 16)
    w_ref:       (9, 128, 128) bf16  packed, zero-padded weights (x @ W layout)
    b_ref:       (9, 128) f32|bf16   packed, zero-padded biases (epilogue dtype)
    out_ref:     (Bp, 128) f32       padded logits
    penulti_ref: (Bp, 128) f32       padded penultimate activations
    """
    h = x_ref[...]          # (Bp, 128) bf16
    h_f32 = None

    # Layers 0..7: Linear + ReLU (first layer + 7 hidden). Static unroll,
    # bf16 MXU inputs, f32 MXU accumulation.
    for k in range(NUM_HIDDEN + 1):
        acc = jnp.dot(h, w_ref[k], preferred_element_type=jnp.float32)
        if BF16_EPILOGUE:
            # v6e/v7x: bias-add + ReLU in bf16 (bf16 VPU), single cast of acc.
            h = jnp.maximum(acc.astype(jnp.bfloat16) + b_ref[k, :], 0)
        else:
            # v5e (no bf16 VPU): f32 epilogue, one cast back to bf16 per layer.
            h_f32 = jnp.maximum(acc + b_ref[k, :], 0.0)
            h = h_f32.astype(jnp.bfloat16)

    # Penultimate activations (lane-dense f32 store).
    if BF16_EPILOGUE:
        penulti_ref[...] = h.astype(jnp.float32)
    else:
        penulti_ref[...] = h_f32

    # Logit layer: Linear(H, C), no activation (lane-dense f32 store).
    logits = jnp.dot(h, w_ref[NUM_LAYERS - 1], preferred_element_type=jnp.float32)
    out_ref[...] = logits + b_ref[NUM_LAYERS - 1, :].astype(jnp.float32)


def pack_params(params, input_size, hidden_size, num_classes):
    """Zero-pad every layer to (LANE, LANE)/(LANE,) and pack into two slabs."""
    w_all = jnp.zeros((NUM_LAYERS, LANE, LANE), jnp.float32)
    b_all = jnp.zeros((NUM_LAYERS, LANE), jnp.float32)

    # Layer 0: Linear(input_size, H)
    w_all = w_all.at[0, :input_size, :hidden_size].set(params["w_in"])
    b_all = b_all.at[0, :hidden_size].set(params["b_in"][0])
    # Layers 1..7: Linear(H, H)
    w_all = w_all.at[1:1 + NUM_HIDDEN, :hidden_size, :hidden_size].set(params["w_hid"])
    b_all = b_all.at[1:1 + NUM_HIDDEN, :hidden_size].set(params["b_hid"][:, 0, :])
    # Layer 8: Linear(H, C)
    w_all = w_all.at[NUM_LAYERS - 1, :hidden_size, :num_classes].set(params["w_out"])
    b_all = b_all.at[NUM_LAYERS - 1, :num_classes].set(params["b_out"][0])

    return {
        "w_all": w_all.astype(jnp.bfloat16),        # bf16 MXU inputs
        "b_all": b_all.astype(_EPILOGUE_DTYPE),     # epilogue dtype (f32 on v5e)
        "input_size": input_size,
        "hidden_size": hidden_size,
        "num_classes": num_classes,
    }


@partial(jax.jit, static_argnames=("hidden_size", "num_classes"))
def vanilla_forward(x, w_all, b_all, *, hidden_size, num_classes):
    """Run the full MLP forward pass in a single fused (jit-ed) Pallas dispatch.

    x: (B, input_size) float32
    Returns (out, penulti) with shapes (B, num_classes), (B, hidden_size).
    """
    B, in_size = x.shape
    Bp = max(SUBLANE_BF16, ((B + SUBLANE_BF16 - 1) // SUBLANE_BF16) * SUBLANE_BF16)

    # Zero-pad the input to a lane-dense (Bp, 128) bf16 tile.
    x_pad = jnp.zeros((Bp, LANE), jnp.bfloat16).at[:B, :in_size].set(
        x.astype(jnp.bfloat16))

    out_shapes = (
        jax.ShapeDtypeStruct((Bp, LANE), jnp.float32),  # padded logits
        jax.ShapeDtypeStruct((Bp, LANE), jnp.float32),  # padded penultimate
    )

    # Problem is tiny -> no grid; every operand lives fully in VMEM.
    vmem_spec = pl.BlockSpec(memory_space=pltpu.VMEM)

    out_pad, pen_pad = pl.pallas_call(
        _vanilla_kernel,
        out_shape=out_shapes,
        in_specs=[vmem_spec, vmem_spec, vmem_spec],
        out_specs=(vmem_spec, vmem_spec),
    )(x_pad, w_all, b_all)

    # Slice the exact results back to module shapes (padded rows are never exposed).
    return out_pad[:B, :num_classes], pen_pad[:B, :hidden_size]


def init_params(key, input_size, hidden_size, num_classes):
    """Deterministic parameter init (PyTorch-style uniform bounds), unpadded."""
    ks = jax.random.split(key, 6)

    def uniform(k, shape, fan_in):
        bound = 1.0 / jnp.sqrt(jnp.float32(fan_in))
        return jax.random.uniform(k, shape, jnp.float32, -bound, bound)

    # Stored already transposed: (in_features, out_features)
    w_in = uniform(ks[0], (input_size, hidden_size), input_size)
    b_in = uniform(ks[1], (1, hidden_size), input_size)
    w_hid = uniform(ks[2], (NUM_HIDDEN, hidden_size, hidden_size), hidden_size)
    b_hid = uniform(ks[3], (NUM_HIDDEN, 1, hidden_size), hidden_size)
    w_out = uniform(ks[4], (hidden_size, num_classes), hidden_size)
    b_out = uniform(ks[5], (1, num_classes), hidden_size)
    return {
        "w_in": w_in, "b_in": b_in,
        "w_hid": w_hid, "b_hid": b_hid,
        "w_out": w_out, "b_out": b_out,
    }


def vanilla_reference(x, params):
    """Pure-JAX f32 reference for correctness check."""
    h = jnp.maximum(x @ params["w_in"] + params["b_in"], 0.0)
    for i in range(NUM_HIDDEN):
        h = jnp.maximum(h @ params["w_hid"][i] + params["b_hid"][i], 0.0)
    out = h @ params["w_out"] + params["b_out"]
    return out, h


if __name__ == "__main__":
    # Synthetic 2D binary classification: 2 input features, 2 classes.
    input_size, hidden_size, num_classes = 2, 32, 2
    batch = 8

    key = jax.random.PRNGKey(0)
    k_x, k_p = jax.random.split(key)
    x = jax.random.normal(k_x, (batch, input_size), dtype=jnp.float32)
    params = init_params(k_p, input_size, hidden_size, num_classes)
    packed = pack_params(params, input_size, hidden_size, num_classes)

    out, penulti = vanilla_forward(
        x, packed["w_all"], packed["b_all"],
        hidden_size=hidden_size, num_classes=num_classes)
    out = jax.block_until_ready(out)
    penulti = jax.block_until_ready(penulti)

    # Sanity check against pure-JAX f32 reference. Tolerance relaxed because the
    # kernel uses bf16 matmul inputs (f32 accumulation) on 9 serial layers.
    ref_out, ref_pen = vanilla_reference(x, params)
    assert out.shape == (batch, num_classes)
    assert penulti.shape == (batch, hidden_size)
    assert jnp.allclose(out, ref_out, atol=5e-2, rtol=5e-2), (
        f"logits mismatch: max abs err {jnp.max(jnp.abs(out - ref_out))}")
    assert jnp.allclose(penulti, ref_pen, atol=5e-2, rtol=5e-2), (
        f"penulti mismatch: max abs err {jnp.max(jnp.abs(penulti - ref_pen))}")

    print("KERNEL_OK")
</pallas_src>

<mosaic_0001>
module attributes {stable_mosaic.version = 11 : i64} {
  func.func @_vanilla_kernel(%arg0: memref<16x128xbf16, #tpu.memory_space<vmem>>, %arg1: memref<9x128x128xbf16, #tpu.memory_space<vmem>>, %arg2: memref<9x128xf32, #tpu.memory_space<vmem>>, %arg3: memref<16x128xf32, #tpu.memory_space<vmem>>, %arg4: memref<16x128xf32, #tpu.memory_space<vmem>>) attributes {dimension_semantics = [], scalar_prefetch = 0 : i64, scratch_operands = 0 : i64, tpu.core_type = #tpu.core_type<tc>} {
    %c0 = arith.constant 0 : index
    %c0_0 = arith.constant 0 : index
    %0 = vector.load %arg0[%c0, %c0_0] : memref<16x128xbf16, #tpu.memory_space<vmem>>, vector<16x128xbf16>
    %c0_1 = arith.constant 0 : index
    %c0_2 = arith.constant 0 : index
    %c0_3 = arith.constant 0 : index
    %1 = vector.load %arg1[%c0_1, %c0_2, %c0_3] : memref<9x128x128xbf16, #tpu.memory_space<vmem>>, vector<1x128x128xbf16>
    %2 = vector.shape_cast %1 : vector<1x128x128xbf16> to vector<128x128xbf16>
    %cst = arith.constant dense<0.000000e+00> : vector<16x128xf32>
    %3 = tpu.matmul %0, %2, %cst {dimension_numbers = #tpu.dot_dimension_numbers<[1], [0], [0], [1], [0, 0, 1, 1], [], []>} : vector<16x128xbf16>, vector<128x128xbf16>, vector<16x128xf32> -> vector<16x128xf32>
    %c0_4 = arith.constant 0 : index
    %c0_5 = arith.constant 0 : index
    %4 = vector.load %arg2[%c0_4, %c0_5] : memref<9x128xf32, #tpu.memory_space<vmem>>, vector<1x128xf32>
    %5 = vector.shape_cast %4 : vector<1x128xf32> to vector<128xf32>
    %6 = vector.shape_cast %5 : vector<128xf32> to vector<1x128xf32>
    %7 = vector.broadcast %6 : vector<1x128xf32> to vector<16x128xf32>
    %8 = arith.addf %3, %7 : vector<16x128xf32>
    %cst_6 = arith.constant 0.000000e+00 : f32
    %9 = vector.broadcast %cst_6 : f32 to vector<16x128xf32>
    %10 = arith.maximumf %8, %9 : vector<16x128xf32>
    %11 = arith.truncf %10 : vector<16x128xf32> to vector<16x128xbf16>
    %c1 = arith.constant 1 : index
    %c0_7 = arith.constant 0 : index
    %c0_8 = arith.constant 0 : index
    %12 = vector.load %arg1[%c1, %c0_7, %c0_8] : memref<9x128x128xbf16, #tpu.memory_space<vmem>>, vector<1x128x128xbf16>
    %13 = vector.shape_cast %12 : vector<1x128x128xbf16> to vector<128x128xbf16>
    %cst_9 = arith.constant dense<0.000000e+00> : vector<16x128xf32>
    %14 = tpu.matmul %11, %13, %cst_9 {dimension_numbers = #tpu.dot_dimension_numbers<[1], [0], [0], [1], [0, 0, 1, 1], [], []>} : vector<16x128xbf16>, vector<128x128xbf16>, vector<16x128xf32> -> vector<16x128xf32>
    %c1_10 = arith.constant 1 : index
    %c0_11 = arith.constant 0 : index
    %15 = vector.load %arg2[%c1_10, %c0_11] : memref<9x128xf32, #tpu.memory_space<vmem>>, vector<1x128xf32>
    %16 = vector.shape_cast %15 : vector<1x128xf32> to vector<128xf32>
    %17 = vector.shape_cast %16 : vector<128xf32> to vector<1x128xf32>
    %18 = vector.broadcast %17 : vector<1x128xf32> to vector<16x128xf32>
    %19 = arith.addf %14, %18 : vector<16x128xf32>
    %cst_12 = arith.constant 0.000000e+00 : f32
    %20 = vector.broadcast %cst_12 : f32 to vector<16x128xf32>
    %21 = arith.maximumf %19, %20 : vector<16x128xf32>
    %22 = arith.truncf %21 : vector<16x128xf32> to vector<16x128xbf16>
    %c2 = arith.constant 2 : index
    %c0_13 = arith.constant 0 : index
    %c0_14 = arith.constant 0 : index
    %23 = vector.load %arg1[%c2, %c0_13, %c0_14] : memref<9x128x128xbf16, #tpu.memory_space<vmem>>, vector<1x128x128xbf16>
    %24 = vector.shape_cast %23 : vector<1x128x128xbf16> to vector<128x128xbf16>
    %cst_15 = arith.constant dense<0.000000e+00> : vector<16x128xf32>
    %25 = tpu.matmul %22, %24, %cst_15 {dimension_numbers = #tpu.dot_dimension_numbers<[1], [0], [0], [1], [0, 0, 1, 1], [], []>} : vector<16x128xbf16>, vector<128x128xbf16>, vector<16x128xf32> -> vector<16x128xf32>
    %c2_16 = arith.constant 2 : index
    %c0_17 = arith.constant 0 : index
    %26 = vector.load %arg2[%c2_16, %c0_17] : memref<9x128xf32, #tpu.memory_space<vmem>>, vector<1x128xf32>
    %27 = vector.shape_cast %26 : vector<1x128xf32> to vector<128xf32>
    %28 = vector.shape_cast %27 : vector<128xf32> to vector<1x128xf32>
    %29 = vector.broadcast %28 : vector<1x128xf32> to vector<16x128xf32>
    %30 = arith.addf %25, %29 : vector<16x128xf32>
    %cst_18 = arith.constant 0.000000e+00 : f32
    %31 = vector.broadcast %cst_18 : f32 to vector<16x128xf32>
    %32 = arith.maximumf %30, %31 : vector<16x128xf32>
    %33 = arith.truncf %32 : vector<16x128xf32> to vector<16x128xbf16>
    %c3 = arith.constant 3 : index
    %c0_19 = arith.constant 0 : index
    %c0_20 = arith.constant 0 : index
    %34 = vector.load %arg1[%c3, %c0_19, %c0_20] : memref<9x128x128xbf16, #tpu.memory_space<vmem>>, vector<1x128x128xbf16>
    %35 = vector.shape_cast %34 : vector<1x128x128xbf16> to vector<128x128xbf16>
    %cst_21 = arith.constant dense<0.000000e+00> : vector<16x128xf32>
    %36 = tpu.matmul %33, %35, %cst_21 {dimension_numbers = #tpu.dot_dimension_numbers<[1], [0], [0], [1], [0, 0, 1, 1], [], []>} : vector<16x128xbf16>, vector<128x128xbf16>, vector<16x128xf32> -> vector<16x128xf32>
    %c3_22 = arith.constant 3 : index
    %c0_23 = arith.constant 0 : index
    %37 = vector.load %arg2[%c3_22, %c0_23] : memref<9x128xf32, #tpu.memory_space<vmem>>, vector<1x128xf32>
    %38 = vector.shape_cast %37 : vector<1x128xf32> to vector<128xf32>
    %39 = vector.shape_cast %38 : vector<128xf32> to vector<1x128xf32>
    %40 = vector.broadcast %39 : vector<1x128xf32> to vector<16x128xf32>
    %41 = arith.addf %36, %40 : vector<16x128xf32>
    %cst_24 = arith.constant 0.000000e+00 : f32
    %42 = vector.broadcast %cst_24 : f32 to vector<16x128xf32>
    %43 = arith.maximumf %41, %42 : vector<16x128xf32>
    %44 = arith.truncf %43 : vector<16x128xf32> to vector<16x128xbf16>
    %c4 = arith.constant 4 : index
    %c0_25 = arith.constant 0 : index
    %c0_26 = arith.constant 0 : index
    %45 = vector.load %arg1[%c4, %c0_25, %c0_26] : memref<9x128x128xbf16, #tpu.memory_space<vmem>>, vector<1x128x128xbf16>
    %46 = vector.shape_cast %45 : vector<1x128x128xbf16> to vector<128x128xbf16>
    %cst_27 = arith.constant dense<0.000000e+00> : vector<16x128xf32>
    %47 = tpu.matmul %44, %46, %cst_27 {dimension_numbers = #tpu.dot_dimension_numbers<[1], [0], [0], [1], [0, 0, 1, 1], [], []>} : vector<16x128xbf16>, vector<128x128xbf16>, vector<16x128xf32> -> vector<16x128xf32>
    %c4_28 = arith.constant 4 : index
    %c0_29 = arith.constant 0 : index
    %48 = vector.load %arg2[%c4_28, %c0_29] : memref<9x128xf32, #tpu.memory_space<vmem>>, vector<1x128xf32>
    %49 = vector.shape_cast %48 : vector<1x128xf32> to vector<128xf32>
    %50 = vector.shape_cast %49 : vector<128xf32> to vector<1x128xf32>
    %51 = vector.broadcast %50 : vector<1x128xf32> to vector<16x128xf32>
    %52 = arith.addf %47, %51 : vector<16x128xf32>
    %cst_30 = arith.constant 0.000000e+00 : f32
    %53 = vector.broadcast %cst_30 : f32 to vector<16x128xf32>
    %54 = arith.maximumf %52, %53 : vector<16x128xf32>
    %55 = arith.truncf %54 : vector<16x128xf32> to vector<16x128xbf16>
    %c5 = arith.constant 5 : index
    %c0_31 = arith.constant 0 : index
    %c0_32 = arith.constant 0 : index
    %56 = vector.load %arg1[%c5, %c0_31, %c0_32] : memref<9x128x128xbf16, #tpu.memory_space<vmem>>, vector<1x128x128xbf16>
    %57 = vector.shape_cast %56 : vector<1x128x128xbf16> to vector<128x128xbf16>
    %cst_33 = arith.constant dense<0.000000e+00> : vector<16x128xf32>
    %58 = tpu.matmul %55, %57, %cst_33 {dimension_numbers = #tpu.dot_dimension_numbers<[1], [0], [0], [1], [0, 0, 1, 1], [], []>} : vector<16x128xbf16>, vector<128x128xbf16>, vector<16x128xf32> -> vector<16x128xf32>
    %c5_34 = arith.constant 5 : index
    %c0_35 = arith.constant 0 : index
    %59 = vector.load %arg2[%c5_34, %c0_35] : memref<9x128xf32, #tpu.memory_space<vmem>>, vector<1x128xf32>
    %60 = vector.shape_cast %59 : vector<1x128xf32> to vector<128xf32>
    %61 = vector.shape_cast %60 : vector<128xf32> to vector<1x128xf32>
    %62 = vector.broadcast %61 : vector<1x128xf32> to vector<16x128xf32>
    %63 = arith.addf %58, %62 : vector<16x128xf32>
    %cst_36 = arith.constant 0.000000e+00 : f32
    %64 = vector.broadcast %cst_36 : f32 to vector<16x128xf32>
    %65 = arith.maximumf %63, %64 : vector<16x128xf32>
    %66 = arith.truncf %65 : vector<16x128xf32> to vector<16x128xbf16>
    %c6 = arith.constant 6 : index
    %c0_37 = arith.constant 0 : index
    %c0_38 = arith.constant 0 : index
    %67 = vector.load %arg1[%c6, %c0_37, %c0_38] : memref<9x128x128xbf16, #tpu.memory_space<vmem>>, vector<1x128x128xbf16>
    %68 = vector.shape_cast %67 : vector<1x128x128xbf16> to vector<128x128xbf16>
    %cst_39 = arith.constant dense<0.000000e+00> : vector<16x128xf32>
    %69 = tpu.matmul %66, %68, %cst_39 {dimension_numbers = #tpu.dot_dimension_numbers<[1], [0], [0], [1], [0, 0, 1, 1], [], []>} : vector<16x128xbf16>, vector<128x128xbf16>, vector<16x128xf32> -> vector<16x128xf32>
    %c6_40 = arith.constant 6 : index
    %c0_41 = arith.constant 0 : index
    %70 = vector.load %arg2[%c6_40, %c0_41] : memref<9x128xf32, #tpu.memory_space<vmem>>, vector<1x128xf32>
    %71 = vector.shape_cast %70 : vector<1x128xf32> to vector<128xf32>
    %72 = vector.shape_cast %71 : vector<128xf32> to vector<1x128xf32>
    %73 = vector.broadcast %72 : vector<1x128xf32> to vector<16x128xf32>
    %74 = arith.addf %69, %73 : vector<16x128xf32>
    %cst_42 = arith.constant 0.000000e+00 : f32
    %75 = vector.broadcast %cst_42 : f32 to vector<16x128xf32>
    %76 = arith.maximumf %74, %75 : vector<16x128xf32>
    %77 = arith.truncf %76 : vector<16x128xf32> to vector<16x128xbf16>
    %c7 = arith.constant 7 : index
    %c0_43 = arith.constant 0 : index
    %c0_44 = arith.constant 0 : index
    %78 = vector.load %arg1[%c7, %c0_43, %c0_44] : memref<9x128x128xbf16, #tpu.memory_space<vmem>>, vector<1x128x128xbf16>
    %79 = vector.shape_cast %78 : vector<1x128x128xbf16> to vector<128x128xbf16>
    %cst_45 = arith.constant dense<0.000000e+00> : vector<16x128xf32>
    %80 = tpu.matmul %77, %79, %cst_45 {dimension_numbers = #tpu.dot_dimension_numbers<[1], [0], [0], [1], [0, 0, 1, 1], [], []>} : vector<16x128xbf16>, vector<128x128xbf16>, vector<16x128xf32> -> vector<16x128xf32>
    %c7_46 = arith.constant 7 : index
    %c0_47 = arith.constant 0 : index
    %81 = vector.load %arg2[%c7_46, %c0_47] : memref<9x128xf32, #tpu.memory_space<vmem>>, vector<1x128xf32>
    %82 = vector.shape_cast %81 : vector<1x128xf32> to vector<128xf32>
    %83 = vector.shape_cast %82 : vector<128xf32> to vector<1x128xf32>
    %84 = vector.broadcast %83 : vector<1x128xf32> to vector<16x128xf32>
    %85 = arith.addf %80, %84 : vector<16x128xf32>
    %cst_48 = arith.constant 0.000000e+00 : f32
    %86 = vector.broadcast %cst_48 : f32 to vector<16x128xf32>
    %87 = arith.maximumf %85, %86 : vector<16x128xf32>
    %88 = arith.truncf %87 : vector<16x128xf32> to vector<16x128xbf16>
    %c0_49 = arith.constant 0 : index
    %c0_50 = arith.constant 0 : index
    %89 = vector.load %arg4[%c0_49, %c0_50] : memref<16x128xf32, #tpu.memory_space<vmem>>, vector<16x128xf32>
    tpu.vector_store %arg4[%c0_49, %c0_50], %87 {strides = array<i32>} : memref<16x128xf32, #tpu.memory_space<vmem>>, vector<16x128xf32>,
    %c8 = arith.constant 8 : index
    %c0_51 = arith.constant 0 : index
    %c0_52 = arith.constant 0 : index
    %90 = vector.load %arg1[%c8, %c0_51, %c0_52] : memref<9x128x128xbf16, #tpu.memory_space<vmem>>, vector<1x128x128xbf16>
    %91 = vector.shape_cast %90 : vector<1x128x128xbf16> to vector<128x128xbf16>
    %cst_53 = arith.constant dense<0.000000e+00> : vector<16x128xf32>
    %92 = tpu.matmul %88, %91, %cst_53 {dimension_numbers = #tpu.dot_dimension_numbers<[1], [0], [0], [1], [0, 0, 1, 1], [], []>} : vector<16x128xbf16>, vector<128x128xbf16>, vector<16x128xf32> -> vector<16x128xf32>
    %c8_54 = arith.constant 8 : index
    %c0_55 = arith.constant 0 : index
    %93 = vector.load %arg2[%c8_54, %c0_55] : memref<9x128xf32, #tpu.memory_space<vmem>>, vector<1x128xf32>
    %94 = vector.shape_cast %93 : vector<1x128xf32> to vector<128xf32>
    %95 = vector.shape_cast %94 : vector<128xf32> to vector<1x128xf32>
    %96 = vector.broadcast %95 : vector<1x128xf32> to vector<16x128xf32>
    %97 = arith.addf %92, %96 : vector<16x128xf32>
    %c0_56 = arith.constant 0 : index
    %c0_57 = arith.constant 0 : index
    %98 = vector.load %arg3[%c0_56, %c0_57] : memref<16x128xf32, #tpu.memory_space<vmem>>, vector<16x128xf32>
    tpu.vector_store %arg3[%c0_56, %c0_57], %97 {strides = array<i32>} : memref<16x128xf32, #tpu.memory_space<vmem>>, vector<16x128xf32>,
    return
  }
}

</mosaic_0001>

<llo_original>
// kernel: vanilla_forward.1
$region0: #{vanilla_forward.1}
  #allocation0 [shape = 'u32[]', space=smem, size = 0x4, offset = 0x4, fixed_abs, tag = 'smem constant byte address 0x4 - core index']
  #allocation1 [shape = 'u32[144,128]{1,0:T(1,128)}', space=vmem, size = 0x12000, scoped, tag = 'internal scratch']
  %s0 = inlined_call_operand.vmem [shape: bf16[16,128], index: 0, kind: input, shape index: {}]
  %s1 = inlined_call_operand.hbm [shape: bf16[9,128,128], index: 1, kind: input, shape index: {}]
  %s2 = inlined_call_operand.vmem [shape: f32[9,128], index: 2, kind: input, shape index: {}]
  %s3 = inlined_call_operand.vmem [shape: f32[16,128], index: 3, kind: output, shape index: {0}]
  %s4 = inlined_call_operand.vmem [shape: f32[16,128], index: 4, kind: output, shape index: {1}]
  %5 = xla_tuple %s3, %s4
  %s6 = sld [smem:[#allocation0]]
  $region34: #{vanilla_forward.1} parent=0
    _
  %s8 = ssub.s32 1, %s6
  %s9 = scalar_select 0, %s8, %s6
  $region1: #{vanilla_forward.1} parent=0
    #allocation2 [shape = 'u8[294912]{0}', space=vmem, size = 0x48000, scoped, tag = 'input window, operand 1, single buffered']
    #allocation3 [shape = 's32[1]{0}', space=sflag, size = 0x4, scoped, tag = 'scoped memory for vanilla_forward.1']
    %10 = vsyncpa [#allocation3], 0
    // Predicated region
    $region2: #{vanilla_forward.1} parent=1 // pred_check
      _
    $region3: #{vanilla_forward.1} parent=1 // pred_check_branch
      %12 = sbr.rel (0) target = $region5
    $region4: #{vanilla_forward.1} parent=1 // pred_region
      _
    $region5: #{vanilla_forward.1} parent=1 // pred_fallthru
      _
    // Predicated region
    $region6: #{vanilla_forward.1} parent=1 // pred_check
      _
    $region7: #{vanilla_forward.1} parent=1 // pred_check_branch
      %14 = sbr.rel (0) target = $region9
    $region8: #{vanilla_forward.1} parent=1 // pred_region
      %s16 = ssub.s32 9216, 9216
      %17 = vsyncadd [#allocation3], %s16
      %s18 = sshll.u32 [#allocation2], 4
      %s19 = int_to_ptr.vmem [resolvable:$true] %s18
      %24 = dma.hbm_to_vmem [thread:$0]  %s1, 9216, %s19, [#allocation3], 64, 64, 4
    $region9: #{vanilla_forward.1} parent=1 // pred_fallthru
      _
    // Predicated region
    $region10: #{vanilla_forward.1} parent=1 // pred_check
      _
    $region11: #{vanilla_forward.1} parent=1 // pred_check_branch
      %26 = sbr.rel (0) target = $region13
    $region12: #{vanilla_forward.1} parent=1 // pred_region
      _
    $region13: #{vanilla_forward.1} parent=1 // pred_fallthru
      _
    // Predicated region
    $region14: #{vanilla_forward.1} parent=1 // pred_check
      _
    $region15: #{vanilla_forward.1} parent=1 // pred_check_branch
      %28 = sbr.rel (0) target = $region17
    $region16: #{vanilla_forward.1} parent=1 // pred_region
      %29 = dma.done [#allocation3], 9216
    $region17: #{vanilla_forward.1} parent=1 // pred_fallthru
      _
    %v31 = vld [vmem:[%s0] sm:$0xf]
    %v32 = vld [vmem:[%s0 + $0x4] sm:$0xf]
    %v33 = vld [vmem:[#allocation2] sm:$0xf]
    %v34 = vld [vmem:[#allocation2 + $0x4] sm:$0xf]
    %v35 = vld [vmem:[#allocation2 + $0x8] sm:$0xf]
    %v36 = vld [vmem:[#allocation2 + $0xc] sm:$0xf]
    %v37 = vld [vmem:[#allocation2 + $0x10] sm:$0xf]
    %v38 = vld [vmem:[#allocation2 + $0x14] sm:$0xf]
    %v39 = vld [vmem:[#allocation2 + $0x18] sm:$0xf]
    %v40 = vld [vmem:[#allocation2 + $0x1c] sm:$0xf]
    %v41 = vld [vmem:[#allocation2 + $0x20] sm:$0xf]
    %v42 = vld [vmem:[#allocation2 + $0x24] sm:$0xf]
    %v43 = vld [vmem:[#allocation2 + $0x28] sm:$0xf]
    %v44 = vld [vmem:[#allocation2 + $0x2c] sm:$0xf]
    %v45 = vld [vmem:[#allocation2 + $0x30] sm:$0xf]
    %v46 = vld [vmem:[#allocation2 + $0x34] sm:$0xf]
    %v47 = vld [vmem:[#allocation2 + $0x38] sm:$0xf]
    %v48 = vld [vmem:[#allocation2 + $0x3c] sm:$0xf]
    %v49 = vld [vmem:[%s2] sm:$0x1]
    %v50 = vlaneseq
    %v51 = vshrl.u32 %v50, 7
    %v52 = vsub.s32 0, %v51
    %v53 = vrot.slane %v49, %v52
    %v56 = vunpack.c.l.b16 %v31
    %v57 = vunpack.c.l.b16 %v32
    %v58 = vpack.c.b16 %v57, %v56
    %v76 = vunpack.c.l.b16 %v33
    %v77 = vunpack.c.l.b16 %v34
    %v78 = vunpack.c.l.b16 %v35
    %v79 = vunpack.c.l.b16 %v36
    %v80 = vunpack.c.l.b16 %v37
    %v81 = vunpack.c.l.b16 %v38
    %v82 = vunpack.c.l.b16 %v39
    %v83 = vunpack.c.l.b16 %v40
    %v84 = vunpack.c.l.b16 %v41
    %v85 = vunpack.c.l.b16 %v42
    %v86 = vunpack.c.l.b16 %v43
    %v87 = vunpack.c.l.b16 %v44
    %v88 = vunpack.c.l.b16 %v45
    %v89 = vunpack.c.l.b16 %v46
    %v90 = vunpack.c.l.b16 %v47
    %v91 = vunpack.c.l.b16 %v48
    %v92 = vpack.c.b16 %v77, %v76
    %v93 = vpack.c.b16 %v79, %v78
    %v94 = vpack.c.b16 %v81, %v80
    %v95 = vpack.c.b16 %v83, %v82
    %v96 = vpack.c.b16 %v85, %v84
    %v97 = vpack.c.b16 %v87, %v86
    %v98 = vpack.c.b16 %v89, %v88
    %v99 = vpack.c.b16 %v91, %v90
    %108 = vmatprep.subr.bf16.mxu0 0
    %109 = vmatpush1.bf16.msra.mxu0 %v92
    %110 = vmatprep.subr.bf16.mxu0 0
    %111 = vmatpush1.bf16.msra.mxu0 %v93
    %112 = vmatprep.subr.bf16.mxu0 0
    %113 = vmatpush1.bf16.msra.mxu0 %v94
    %114 = vmatprep.subr.bf16.mxu0 0
    %115 = vmatpush1.bf16.msra.mxu0 %v95
    %116 = vmatprep.subr.bf16.mxu0 0
    %117 = vmatpush1.bf16.msra.mxu0 %v96
    %118 = vmatprep.subr.bf16.mxu0 0
    %119 = vmatpush1.bf16.msra.mxu0 %v97
    %120 = vmatprep.subr.bf16.mxu0 0
    %121 = vmatpush1.bf16.msra.mxu0 %v98
    %122 = vmatprep.subr.bf16.mxu0 0
    %123 = vmatpush1.bf16.msra.mxu0 %v99
    %124 = vmatprep.subr.bf16.mxu0 0
    %125 = vmatpush1.bf16.msra.mxu0 0
    %126 = vmatprep.subr.bf16.mxu0 0
    %127 = vmatpush1.bf16.msra.mxu0 0
    %128 = vmatprep.subr.bf16.mxu0 0
    %129 = vmatpush1.bf16.msra.mxu0 0
    %130 = vmatprep.subr.bf16.mxu0 0
    %131 = vmatpush1.bf16.msra.mxu0 0
    %132 = vmatprep.subr.bf16.mxu0 0
    %133 = vmatpush1.bf16.msra.mxu0 0
    %134 = vmatprep.subr.bf16.mxu0 0
    %135 = vmatpush1.bf16.msra.mxu0 0
    %136 = vmatprep.subr.bf16.mxu0 0
    %137 = vmatpush1.bf16.msra.mxu0 0
    %138 = vmatprep.subr.bf16.mxu0 0
    %139 = vmatpush1.bf16.msra.mxu0 0
    %140 = vmatprep.mubr.bf16.mxu0 0
    %141 = vmatmul.mubr.bf16.gmra.mrb[0].mxu0 %v58
    %v142 = vpop.f32.mrb[0].mxu0
    %v143 = vadd.f32 %v53, %v142
    %v144 = vpop.f32.mrb[0].mxu0
    %v145 = vpop.f32.mrb[0].mxu0
    %v146 = vadd.f32 %v53, %v145
    %v147 = vpop.f32.mrb[0].mxu0
    %148 = vdwg.mxu0
    %v149 = vmax.f32 %v143, 0.0
    %v150 = vmax.f32 %v146, 0.0
    %v151 = vpack.c.bf16 %v150, %v149
    %s152 = scalar_lea.vmem [#allocation2], 64
    %v153 = vld [vmem:[%s152] sm:$0xf]
    %v154 = vld [vmem:[%s152 + $0x4] sm:$0xf]
    %v155 = vld [vmem:[%s152 + $0x8] sm:$0xf]
    %v156 = vld [vmem:[%s152 + $0xc] sm:$0xf]
    %v157 = vld [vmem:[%s152 + $0x10] sm:$0xf]
    %v158 = vld [vmem:[%s152 + $0x14] sm:$0xf]
    %v159 = vld [vmem:[%s152 + $0x18] sm:$0xf]
    %v160 = vld [vmem:[%s152 + $0x1c] sm:$0xf]
    %v161 = vld [vmem:[%s152 + $0x20] sm:$0xf]
    %v162 = vld [vmem:[%s152 + $0x24] sm:$0xf]
    %v163 = vld [vmem:[%s152 + $0x28] sm:$0xf]
    %v164 = vld [vmem:[%s152 + $0x2c] sm:$0xf]
    %v165 = vld [vmem:[%s152 + $0x30] sm:$0xf]
    %v166 = vld [vmem:[%s152 + $0x34] sm:$0xf]
    %v167 = vld [vmem:[%s152 + $0x38] sm:$0xf]
    %v168 = vld [vmem:[%s152 + $0x3c] sm:$0xf]
    %v169 = vld [vmem:[%s2 + $0x1] sm:$0x1]
    %v170 = vlaneseq
    %v171 = vshrl.u32 %v170, 7
    %v172 = vsub.s32 0, %v171
    %v173 = vrot.slane %v169, %v172
    %v190 = vunpack.c.l.b16 %v153
    %v191 = vunpack.c.l.b16 %v154
    %v192 = vunpack.c.l.b16 %v155
    %v193 = vunpack.c.l.b16 %v156
    %v194 = vunpack.c.l.b16 %v157
    %v195 = vunpack.c.l.b16 %v158
    %v196 = vunpack.c.l.b16 %v159
    %v197 = vunpack.c.l.b16 %v160
    %v198 = vunpack.c.l.b16 %v161
    %v199 = vunpack.c.l.b16 %v162
    %v200 = vunpack.c.l.b16 %v163
    %v201 = vunpack.c.l.b16 %v164
    %v202 = vunpack.c.l.b16 %v165
    %v203 = vunpack.c.l.b16 %v166
    %v204 = vunpack.c.l.b16 %v167
    %v205 = vunpack.c.l.b16 %v168
    %v206 = vpack.c.b16 %v191, %v190
    %v207 = vpack.c.b16 %v193, %v192
    %v208 = vpack.c.b16 %v195, %v194
    %v209 = vpack.c.b16 %v197, %v196
    %v210 = vpack.c.b16 %v199, %v198
    %v211 = vpack.c.b16 %v201, %v200
    %v212 = vpack.c.b16 %v203, %v202
    %v213 = vpack.c.b16 %v205, %v204
    %222 = vmatprep.subr.bf16.mxu0 0
    %223 = vmatpush1.bf16.msra.mxu0 %v206
    %224 = vmatprep.subr.bf16.mxu0 0
    %225 = vmatpush1.bf16.msra.mxu0 %v207
    %226 = vmatprep.subr.bf16.mxu0 0
    %227 = vmatpush1.bf16.msra.mxu0 %v208
    %228 = vmatprep.subr.bf16.mxu0 0
    %229 = vmatpush1.bf16.msra.mxu0 %v209
    %230 = vmatprep.subr.bf16.mxu0 0
    %231 = vmatpush1.bf16.msra.mxu0 %v210
    %232 = vmatprep.subr.bf16.mxu0 0
    %233 = vmatpush1.bf16.msra.mxu0 %v211
    %234 = vmatprep.subr.bf16.mxu0 0
    %235 = vmatpush1.bf16.msra.mxu0 %v212
    %236 = vmatprep.subr.bf16.mxu0 0
    %237 = vmatpush1.bf16.msra.mxu0 %v213
    %238 = vmatprep.subr.bf16.mxu0 0
    %239 = vmatpush1.bf16.msra.mxu0 0
    %240 = vmatprep.subr.bf16.mxu0 0
    %241 = vmatpush1.bf16.msra.mxu0 0
    %242 = vmatprep.subr.bf16.mxu0 0
    %243 = vmatpush1.bf16.msra.mxu0 0
    %244 = vmatprep.subr.bf16.mxu0 0
    %245 = vmatpush1.bf16.msra.mxu0 0
    %246 = vmatprep.subr.bf16.mxu0 0
    %247 = vmatpush1.bf16.msra.mxu0 0
    %248 = vmatprep.subr.bf16.mxu0 0
    %249 = vmatpush1.bf16.msra.mxu0 0
    %250 = vmatprep.subr.bf16.mxu0 0
    %251 = vmatpush1.bf16.msra.mxu0 0
    %252 = vmatprep.subr.bf16.mxu0 0
    %253 = vmatpush1.bf16.msra.mxu0 0
    %254 = vmatprep.mubr.bf16.mxu0 0
    %255 = vmatmul.mubr.bf16.gmra.mrb[0].mxu0 %v151
    %v256 = vpop.f32.mrb[0].mxu0
    %v257 = vadd.f32 %v173, %v256
    %v258 = vpop.f32.mrb[0].mxu0
    %v259 = vpop.f32.mrb[0].mxu0
    %v260 = vadd.f32 %v173, %v259
    %v261 = vpop.f32.mrb[0].mxu0
    %262 = vdwg.mxu0
    %v263 = vmax.f32 %v257, 0.0
    %v264 = vmax.f32 %v260, 0.0
    %v265 = vpack.c.bf16 %v264, %v263
    %s266 = scalar_lea.vmem [#allocation2], 128
    %v267 = vld [vmem:[%s266] sm:$0xf]
    %v268 = vld [vmem:[%s266 + $0x4] sm:$0xf]
    %v269 = vld [vmem:[%s266 + $0x8] sm:$0xf]
    %v270 = vld [vmem:[%s266 + $0xc] sm:$0xf]
    %v271 = vld [vmem:[%s266 + $0x10] sm:$0xf]
    %v272 = vld [vmem:[%s266 + $0x14] sm:$0xf]
    %v273 = vld [vmem:[%s266 + $0x18] sm:$0xf]
    %v274 = vld [vmem:[%s266 + $0x1c] sm:$0xf]
    %v275 = vld [vmem:[%s266 + $0x20] sm:$0xf]
    %v276 = vld [vmem:[%s266 + $0x24] sm:$0xf]
    %v277 = vld [vmem:[%s266 + $0x28] sm:$0xf]
    %v278 = vld [vmem:[%s266 + $0x2c] sm:$0xf]
    %v279 = vld [vmem:[%s266 + $0x30] sm:$0xf]
    %v280 = vld [vmem:[%s266 + $0x34] sm:$0xf]
    %v281 = vld [vmem:[%s266 + $0x38] sm:$0xf]
    %v282 = vld [vmem:[%s266 + $0x3c] sm:$0xf]
    %v283 = vld [vmem:[%s2 + $0x2] sm:$0x1]
    %v284 = vlaneseq
    %v285 = vshrl.u32 %v284, 7
    %v286 = vsub.s32 0, %v285
    %v287 = vrot.slane %v283, %v286
    %v304 = vunpack.c.l.b16 %v267
    %v305 = vunpack.c.l.b16 %v268
    %v306 = vunpack.c.l.b16 %v269
    %v307 = vunpack.c.l.b16 %v270
    %v308 = vunpack.c.l.b16 %v271
    %v309 = vunpack.c.l.b16 %v272
    %v310 = vunpack.c.l.b16 %v273
    %v311 = vunpack.c.l.b16 %v274
    %v312 = vunpack.c.l.b16 %v275
    %v313 = vunpack.c.l.b16 %v276
    %v314 = vunpack.c.l.b16 %v277
    %v315 = vunpack.c.l.b16 %v278
    %v316 = vunpack.c.l.b16 %v279
    %v317 = vunpack.c.l.b16 %v280
    %v318 = vunpack.c.l.b16 %v281
    %v319 = vunpack.c.l.b16 %v282
    %v320 = vpack.c.b16 %v305, %v304
    %v321 = vpack.c.b16 %v307, %v306
    %v322 = vpack.c.b16 %v309, %v308
    %v323 = vpack.c.b16 %v311, %v310
    %v324 = vpack.c.b16 %v313, %v312
    %v325 = vpack.c.b16 %v315, %v314
    %v326 = vpack.c.b16 %v317, %v316
    %v327 = vpack.c.b16 %v319, %v318
    %336 = vmatprep.subr.bf16.mxu0 0
    %337 = vmatpush1.bf16.msra.mxu0 %v320
    %338 = vmatprep.subr.bf16.mxu0 0
    %339 = vmatpush1.bf16.msra.mxu0 %v321
    %340 = vmatprep.subr.bf16.mxu0 0
    %341 = vmatpush1.bf16.msra.mxu0 %v322
    %342 = vmatprep.subr.bf16.mxu0 0
    %343 = vmatpush1.bf16.msra.mxu0 %v323
    %344 = vmatprep.subr.bf16.mxu0 0
    %345 = vmatpush1.bf16.msra.mxu0 %v324
    %346 = vmatprep.subr.bf16.mxu0 0
    %347 = vmatpush1.bf16.msra.mxu0 %v325
    %348 = vmatprep.subr.bf16.mxu0 0
    %349 = vmatpush1.bf16.msra.mxu0 %v326
    %350 = vmatprep.subr.bf16.mxu0 0
    %351 = vmatpush1.bf16.msra.mxu0 %v327
    %352 = vmatprep.subr.bf16.mxu0 0
    %353 = vmatpush1.bf16.msra.mxu0 0
    %354 = vmatprep.subr.bf16.mxu0 0
    %355 = vmatpush1.bf16.msra.mxu0 0
    %356 = vmatprep.subr.bf16.mxu0 0
    %357 = vmatpush1.bf16.msra.mxu0 0
    %358 = vmatprep.subr.bf16.mxu0 0
    %359 = vmatpush1.bf16.msra.mxu0 0
    %360 = vmatprep.subr.bf16.mxu0 0
    %361 = vmatpush1.bf16.msra.mxu0 0
    %362 = vmatprep.subr.bf16.mxu0 0
    %363 = vmatpush1.bf16.msra.mxu0 0
    %364 = vmatprep.subr.bf16.mxu0 0
    %365 = vmatpush1.bf16.msra.mxu0 0
    %366 = vmatprep.subr.bf16.mxu0 0
    %367 = vmatpush1.bf16.msra.mxu0 0
    %368 = vmatprep.mubr.bf16.mxu0 0
    %369 = vmatmul.mubr.bf16.gmra.mrb[0].mxu0 %v265
    %v370 = vpop.f32.mrb[0].mxu0
    %v371 = vadd.f32 %v287, %v370
    %v372 = vpop.f32.mrb[0].mxu0
    %v373 = vpop.f32.mrb[0].mxu0
    %v374 = vadd.f32 %v287, %v373
    %v375 = vpop.f32.mrb[0].mxu0
    %376 = vdwg.mxu0
    %v377 = vmax.f32 %v371, 0.0
    %v378 = vmax.f32 %v374, 0.0
    %v379 = vpack.c.bf16 %v378, %v377
    %s380 = scalar_lea.vmem [#allocation2], 192
    %v381 = vld [vmem:[%s380] sm:$0xf]
    %v382 = vld [vmem:[%s380 + $0x4] sm:$0xf]
    %v383 = vld [vmem:[%s380 + $0x8] sm:$0xf]
    %v384 = vld [vmem:[%s380 + $0xc] sm:$0xf]
    %v385 = vld [vmem:[%s380 + $0x10] sm:$0xf]
    %v386 = vld [vmem:[%s380 + $0x14] sm:$0xf]
    %v387 = vld [vmem:[%s380 + $0x18] sm:$0xf]
    %v388 = vld [vmem:[%s380 + $0x1c] sm:$0xf]
    %v389 = vld [vmem:[%s380 + $0x20] sm:$0xf]
    %v390 = vld [vmem:[%s380 + $0x24] sm:$0xf]
    %v391 = vld [vmem:[%s380 + $0x28] sm:$0xf]
    %v392 = vld [vmem:[%s380 + $0x2c] sm:$0xf]
    %v393 = vld [vmem:[%s380 + $0x30] sm:$0xf]
    %v394 = vld [vmem:[%s380 + $0x34] sm:$0xf]
    %v395 = vld [vmem:[%s380 + $0x38] sm:$0xf]
    %v396 = vld [vmem:[%s380 + $0x3c] sm:$0xf]
    %v397 = vld [vmem:[%s2 + $0x3] sm:$0x1]
    %v398 = vlaneseq
    %v399 = vshrl.u32 %v398, 7
    %v400 = vsub.s32 0, %v399
    %v401 = vrot.slane %v397, %v400
    %v418 = vunpack.c.l.b16 %v381
    %v419 = vunpack.c.l.b16 %v382
    %v420 = vunpack.c.l.b16 %v383
    %v421 = vunpack.c.l.b16 %v384
    %v422 = vunpack.c.l.b16 %v385
    %v423 = vunpack.c.l.b16 %v386
    %v424 = vunpack.c.l.b16 %v387
    %v425 = vunpack.c.l.b16 %v388
    %v426 = vunpack.c.l.b16 %v389
    %v427 = vunpack.c.l.b16 %v390
    %v428 = vunpack.c.l.b16 %v391
    %v429 = vunpack.c.l.b16 %v392
    %v430 = vunpack.c.l.b16 %v393
    %v431 = vunpack.c.l.b16 %v394
    %v432 = vunpack.c.l.b16 %v395
    %v433 = vunpack.c.l.b16 %v396
    %v434 = vpack.c.b16 %v419, %v418
    %v435 = vpack.c.b16 %v421, %v420
    %v436 = vpack.c.b16 %v423, %v422
    %v437 = vpack.c.b16 %v425, %v424
    %v438 = vpack.c.b16 %v427, %v426
    %v439 = vpack.c.b16 %v429, %v428
    %v440 = vpack.c.b16 %v431, %v430
    %v441 = vpack.c.b16 %v433, %v432
    %450 = vmatprep.subr.bf16.mxu0 0
    %451 = vmatpush1.bf16.msra.mxu0 %v434
    %452 = vmatprep.subr.bf16.mxu0 0
    %453 = vmatpush1.bf16.msra.mxu0 %v435
    %454 = vmatprep.subr.bf16.mxu0 0
    %455 = vmatpush1.bf16.msra.mxu0 %v436
    %456 = vmatprep.subr.bf16.mxu0 0
    %457 = vmatpush1.bf16.msra.mxu0 %v437
    %458 = vmatprep.subr.bf16.mxu0 0
    %459 = vmatpush1.bf16.msra.mxu0 %v438
    %460 = vmatprep.subr.bf16.mxu0 0
    %461 = vmatpush1.bf16.msra.mxu0 %v439
    %462 = vmatprep.subr.bf16.mxu0 0
    %463 = vmatpush1.bf16.msra.mxu0 %v440
    %464 = vmatprep.subr.bf16.mxu0 0
    %465 = vmatpush1.bf16.msra.mxu0 %v441
    %466 = vmatprep.subr.bf16.mxu0 0
    %467 = vmatpush1.bf16.msra.mxu0 0
    %468 = vmatprep.subr.bf16.mxu0 0
    %469 = vmatpush1.bf16.msra.mxu0 0
    %470 = vmatprep.subr.bf16.mxu0 0
    %471 = vmatpush1.bf16.msra.mxu0 0
    %472 = vmatprep.subr.bf16.mxu0 0
    %473 = vmatpush1.bf16.msra.mxu0 0
    %474 = vmatprep.subr.bf16.mxu0 0
    %475 = vmatpush1.bf16.msra.mxu0 0
    %476 = vmatprep.subr.bf16.mxu0 0
    %477 = vmatpush1.bf16.msra.mxu0 0
    %478 = vmatprep.subr.bf16.mxu0 0
    %479 = vmatpush1.bf16.msra.mxu0 0
    %480 = vmatprep.subr.bf16.mxu0 0
    %481 = vmatpush1.bf16.msra.mxu0 0
    %482 = vmatprep.mubr.bf16.mxu0 0
    %483 = vmatmul.mubr.bf16.gmra.mrb[0].mxu0 %v379
    %v484 = vpop.f32.mrb[0].mxu0
    %v485 = vadd.f32 %v401, %v484
    %v486 = vpop.f32.mrb[0].mxu0
    %v487 = vpop.f32.mrb[0].mxu0
    %v488 = vadd.f32 %v401, %v487
    %v489 = vpop.f32.mrb[0].mxu0
    %490 = vdwg.mxu0
    %v491 = vmax.f32 %v485, 0.0
    %v492 = vmax.f32 %v488, 0.0
    %v493 = vpack.c.bf16 %v492, %v491
    %s494 = scalar_lea.vmem [#allocation2], 256
    %v495 = vld [vmem:[%s494] sm:$0xf]
    %v496 = vld [vmem:[%s494 + $0x4] sm:$0xf]
    %v497 = vld [vmem:[%s494 + $0x8] sm:$0xf]
    %v498 = vld [vmem:[%s494 + $0xc] sm:$0xf]
    %v499 = vld [vmem:[%s494 + $0x10] sm:$0xf]
    %v500 = vld [vmem:[%s494 + $0x14] sm:$0xf]
    %v501 = vld [vmem:[%s494 + $0x18] sm:$0xf]
    %v502 = vld [vmem:[%s494 + $0x1c] sm:$0xf]
    %v503 = vld [vmem:[%s494 + $0x20] sm:$0xf]
    %v504 = vld [vmem:[%s494 + $0x24] sm:$0xf]
    %v505 = vld [vmem:[%s494 + $0x28] sm:$0xf]
    %v506 = vld [vmem:[%s494 + $0x2c] sm:$0xf]
    %v507 = vld [vmem:[%s494 + $0x30] sm:$0xf]
    %v508 = vld [vmem:[%s494 + $0x34] sm:$0xf]
    %v509 = vld [vmem:[%s494 + $0x38] sm:$0xf]
    %v510 = vld [vmem:[%s494 + $0x3c] sm:$0xf]
    %v511 = vld [vmem:[%s2 + $0x4] sm:$0x1]
    %v512 = vlaneseq
    %v513 = vshrl.u32 %v512, 7
    %v514 = vsub.s32 0, %v513
    %v515 = vrot.slane %v511, %v514
    %v532 = vunpack.c.l.b16 %v495
    %v533 = vunpack.c.l.b16 %v496
    %v534 = vunpack.c.l.b16 %v497
    %v535 = vunpack.c.l.b16 %v498
    %v536 = vunpack.c.l.b16 %v499
    %v537 = vunpack.c.l.b16 %v500
    %v538 = vunpack.c.l.b16 %v501
    %v539 = vunpack.c.l.b16 %v502
    %v540 = vunpack.c.l.b16 %v503
    %v541 = vunpack.c.l.b16 %v504
    %v542 = vunpack.c.l.b16 %v505
    %v543 = vunpack.c.l.b16 %v506
    %v544 = vunpack.c.l.b16 %v507
    %v545 = vunpack.c.l.b16 %v508
    %v546 = vunpack.c.l.b16 %v509
    %v547 = vunpack.c.l.b16 %v510
    %v548 = vpack.c.b16 %v533, %v532
    %v549 = vpack.c.b16 %v535, %v534
    %v550 = vpack.c.b16 %v537, %v536
    %v551 = vpack.c.b16 %v539, %v538
    %v552 = vpack.c.b16 %v541, %v540
    %v553 = vpack.c.b16 %v543, %v542
    %v554 = vpack.c.b16 %v545, %v544
    %v555 = vpack.c.b16 %v547, %v546
    %564 = vmatprep.subr.bf16.mxu0 0
    %565 = vmatpush1.bf16.msra.mxu0 %v548
    %566 = vmatprep.subr.bf16.mxu0 0
    %567 = vmatpush1.bf16.msra.mxu0 %v549
    %568 = vmatprep.subr.bf16.mxu0 0
    %569 = vmatpush1.bf16.msra.mxu0 %v550
    %570 = vmatprep.subr.bf16.mxu0 0
    %571 = vmatpush1.bf16.msra.mxu0 %v551
    %572 = vmatprep.subr.bf16.mxu0 0
    %573 = vmatpush1.bf16.msra.mxu0 %v552
    %574 = vmatprep.subr.bf16.mxu0 0
    %575 = vmatpush1.bf16.msra.mxu0 %v553
    %576 = vmatprep.subr.bf16.mxu0 0
    %577 = vmatpush1.bf16.msra.mxu0 %v554
    %578 = vmatprep.subr.bf16.mxu0 0
    %579 = vmatpush1.bf16.msra.mxu0 %v555
    %580 = vmatprep.subr.bf16.mxu0 0
    %581 = vmatpush1.bf16.msra.mxu0 0
    %582 = vmatprep.subr.bf16.mxu0 0
    %583 = vmatpush1.bf16.msra.mxu0 0
    %584 = vmatprep.subr.bf16.mxu0 0
    %585 = vmatpush1.bf16.msra.mxu0 0
    %586 = vmatprep.subr.bf16.mxu0 0
    %587 = vmatpush1.bf16.msra.mxu0 0
    %588 = vmatprep.subr.bf16.mxu0 0
    %589 = vmatpush1.bf16.msra.mxu0 0
    %590 = vmatprep.subr.bf16.mxu0 0
    %591 = vmatpush1.bf16.msra.mxu0 0
    %592 = vmatprep.subr.bf16.mxu0 0
    %593 = vmatpush1.bf16.msra.mxu0 0
    %594 = vmatprep.subr.bf16.mxu0 0
    %595 = vmatpush1.bf16.msra.mxu0 0
    %596 = vmatprep.mubr.bf16.mxu0 0
    %597 = vmatmul.mubr.bf16.gmra.mrb[0].mxu0 %v493
    %v598 = vpop.f32.mrb[0].mxu0
    %v599 = vadd.f32 %v515, %v598
    %v600 = vpop.f32.mrb[0].mxu0
    %v601 = vpop.f32.mrb[0].mxu0
    %v602 = vadd.f32 %v515, %v601
    %v603 = vpop.f32.mrb[0].mxu0
    %604 = vdwg.mxu0
    %v605 = vmax.f32 %v599, 0.0
    %v606 = vmax.f32 %v602, 0.0
    %v607 = vpack.c.bf16 %v606, %v605
    %s608 = scalar_lea.vmem [#allocation2], 320
    %v609 = vld [vmem:[%s608] sm:$0xf]
    %v610 = vld [vmem:[%s608 + $0x4] sm:$0xf]
    %v611 = vld [vmem:[%s608 + $0x8] sm:$0xf]
    %v612 = vld [vmem:[%s608 + $0xc] sm:$0xf]
    %v613 = vld [vmem:[%s608 + $0x10] sm:$0xf]
    %v614 = vld [vmem:[%s608 + $0x14] sm:$0xf]
    %v615 = vld [vmem:[%s608 + $0x18] sm:$0xf]
    %v616 = vld [vmem:[%s608 + $0x1c] sm:$0xf]
    %v617 = vld [vmem:[%s608 + $0x20] sm:$0xf]
    %v618 = vld [vmem:[%s608 + $0x24] sm:$0xf]
    %v619 = vld [vmem:[%s608 + $0x28] sm:$0xf]
    %v620 = vld [vmem:[%s608 + $0x2c] sm:$0xf]
    %v621 = vld [vmem:[%s608 + $0x30] sm:$0xf]
    %v622 = vld [vmem:[%s608 + $0x34] sm:$0xf]
    %v623 = vld [vmem:[%s608 + $0x38] sm:$0xf]
    %v624 = vld [vmem:[%s608 + $0x3c] sm:$0xf]
    %v625 = vld [vmem:[%s2 + $0x5] sm:$0x1]
    %v626 = vlaneseq
    %v627 = vshrl.u32 %v626, 7
    %v628 = vsub.s32 0, %v627
    %v629 = vrot.slane %v625, %v628
    %v646 = vunpack.c.l.b16 %v609
    %v647 = vunpack.c.l.b16 %v610
    %v648 = vunpack.c.l.b16 %v611
    %v649 = vunpack.c.l.b16 %v612
    %v650 = vunpack.c.l.b16 %v613
    %v651 = vunpack.c.l.b16 %v614
    %v652 = vunpack.c.l.b16 %v615
    %v653 = vunpack.c.l.b16 %v616
    %v654 = vunpack.c.l.b16 %v617
    %v655 = vunpack.c.l.b16 %v618
    %v656 = vunpack.c.l.b16 %v619
    %v657 = vunpack.c.l.b16 %v620
    %v658 = vunpack.c.l.b16 %v621
    %v659 = vunpack.c.l.b16 %v622
    %v660 = vunpack.c.l.b16 %v623
    %v661 = vunpack.c.l.b16 %v624
    %v662 = vpack.c.b16 %v647, %v646
    %v663 = vpack.c.b16 %v649, %v648
    %v664 = vpack.c.b16 %v651, %v650
    %v665 = vpack.c.b16 %v653, %v652
    %v666 = vpack.c.b16 %v655, %v654
    %v667 = vpack.c.b16 %v657, %v656
    %v668 = vpack.c.b16 %v659, %v658
    %v669 = vpack.c.b16 %v661, %v660
    %678 = vmatprep.subr.bf16.mxu0 0
    %679 = vmatpush1.bf16.msra.mxu0 %v662
    %680 = vmatprep.subr.bf16.mxu0 0
    %681 = vmatpush1.bf16.msra.mxu0 %v663
    %682 = vmatprep.subr.bf16.mxu0 0
    %683 = vmatpush1.bf16.msra.mxu0 %v664
    %684 = vmatprep.subr.bf16.mxu0 0
    %685 = vmatpush1.bf16.msra.mxu0 %v665
    %686 = vmatprep.subr.bf16.mxu0 0
    %687 = vmatpush1.bf16.msra.mxu0 %v666
    %688 = vmatprep.subr.bf16.mxu0 0
    %689 = vmatpush1.bf16.msra.mxu0 %v667
    %690 = vmatprep.subr.bf16.mxu0 0
    %691 = vmatpush1.bf16.msra.mxu0 %v668
    %692 = vmatprep.subr.bf16.mxu0 0
    %693 = vmatpush1.bf16.msra.mxu0 %v669
    %694 = vmatprep.subr.bf16.mxu0 0
    %695 = vmatpush1.bf16.msra.mxu0 0
    %696 = vmatprep.subr.bf16.mxu0 0
    %697 = vmatpush1.bf16.msra.mxu0 0
    %698 = vmatprep.subr.bf16.mxu0 0
    %699 = vmatpush1.bf16.msra.mxu0 0
    %700 = vmatprep.subr.bf16.mxu0 0
    %701 = vmatpush1.bf16.msra.mxu0 0
    %702 = vmatprep.subr.bf16.mxu0 0
    %703 = vmatpush1.bf16.msra.mxu0 0
    %704 = vmatprep.subr.bf16.mxu0 0
    %705 = vmatpush1.bf16.msra.mxu0 0
    %706 = vmatprep.subr.bf16.mxu0 0
    %707 = vmatpush1.bf16.msra.mxu0 0
    %708 = vmatprep.subr.bf16.mxu0 0
    %709 = vmatpush1.bf16.msra.mxu0 0
    %710 = vmatprep.mubr.bf16.mxu0 0
    %711 = vmatmul.mubr.bf16.gmra.mrb[0].mxu0 %v607
    %v712 = vpop.f32.mrb[0].mxu0
    %v713 = vadd.f32 %v629, %v712
    %v714 = vpop.f32.mrb[0].mxu0
    %v715 = vpop.f32.mrb[0].mxu0
    %v716 = vadd.f32 %v629, %v715
    %v717 = vpop.f32.mrb[0].mxu0
    %718 = vdwg.mxu0
    %v719 = vmax.f32 %v713, 0.0
    %v720 = vmax.f32 %v716, 0.0
    %v721 = vpack.c.bf16 %v720, %v719
    %s722 = scalar_lea.vmem [#allocation2], 384
    %v723 = vld [vmem:[%s722] sm:$0xf]
    %v724 = vld [vmem:[%s722 + $0x4] sm:$0xf]
    %v725 = vld [vmem:[%s722 + $0x8] sm:$0xf]
    %v726 = vld [vmem:[%s722 + $0xc] sm:$0xf]
    %v727 = vld [vmem:[%s722 + $0x10] sm:$0xf]
    %v728 = vld [vmem:[%s722 + $0x14] sm:$0xf]
    %v729 = vld [vmem:[%s722 + $0x18] sm:$0xf]
    %v730 = vld [vmem:[%s722 + $0x1c] sm:$0xf]
    %v731 = vld [vmem:[%s722 + $0x20] sm:$0xf]
    %v732 = vld [vmem:[%s722 + $0x24] sm:$0xf]
    %v733 = vld [vmem:[%s722 + $0x28] sm:$0xf]
    %v734 = vld [vmem:[%s722 + $0x2c] sm:$0xf]
    %v735 = vld [vmem:[%s722 + $0x30] sm:$0xf]
    %v736 = vld [vmem:[%s722 + $0x34] sm:$0xf]
    %v737 = vld [vmem:[%s722 + $0x38] sm:$0xf]
    %v738 = vld [vmem:[%s722 + $0x3c] sm:$0xf]
    %v739 = vld [vmem:[%s2 + $0x6] sm:$0x1]
    %v740 = vlaneseq
    %v741 = vshrl.u32 %v740, 7
    %v742 = vsub.s32 0, %v741
    %v743 = vrot.slane %v739, %v742
    %v760 = vunpack.c.l.b16 %v723
    %v761 = vunpack.c.l.b16 %v724
    %v762 = vunpack.c.l.b16 %v725
    %v763 = vunpack.c.l.b16 %v726
    %v764 = vunpack.c.l.b16 %v727
    %v765 = vunpack.c.l.b16 %v728
    %v766 = vunpack.c.l.b16 %v729
    %v767 = vunpack.c.l.b16 %v730
    %v768 = vunpack.c.l.b16 %v731
    %v769 = vunpack.c.l.b16 %v732
    %v770 = vunpack.c.l.b16 %v733
    %v771 = vunpack.c.l.b16 %v734
    %v772 = vunpack.c.l.b16 %v735
    %v773 = vunpack.c.l.b16 %v736
    %v774 = vunpack.c.l.b16 %v737
    %v775 = vunpack.c.l.b16 %v738
    %v776 = vpack.c.b16 %v761, %v760
    %v777 = vpack.c.b16 %v763, %v762
    %v778 = vpack.c.b16 %v765, %v764
    %v779 = vpack.c.b16 %v767, %v766
    %v780 = vpack.c.b16 %v769, %v768
    %v781 = vpack.c.b16 %v771, %v770
    %v782 = vpack.c.b16 %v773, %v772
    %v783 = vpack.c.b16 %v775, %v774
    %792 = vmatprep.subr.bf16.mxu0 0
    %793 = vmatpush1.bf16.msra.mxu0 %v776
    %794 = vmatprep.subr.bf16.mxu0 0
    %795 = vmatpush1.bf16.msra.mxu0 %v777
    %796 = vmatprep.subr.bf16.mxu0 0
    %797 = vmatpush1.bf16.msra.mxu0 %v778
    %798 = vmatprep.subr.bf16.mxu0 0
    %799 = vmatpush1.bf16.msra.mxu0 %v779
    %800 = vmatprep.subr.bf16.mxu0 0
    %801 = vmatpush1.bf16.msra.mxu0 %v780
    %802 = vmatprep.subr.bf16.mxu0 0
    %803 = vmatpush1.bf16.msra.mxu0 %v781
    %804 = vmatprep.subr.bf16.mxu0 0
    %805 = vmatpush1.bf16.msra.mxu0 %v782
    %806 = vmatprep.subr.bf16.mxu0 0
    %807 = vmatpush1.bf16.msra.mxu0 %v783
    %808 = vmatprep.subr.bf16.mxu0 0
    %809 = vmatpush1.bf16.msra.mxu0 0
    %810 = vmatprep.subr.bf16.mxu0 0
    %811 = vmatpush1.bf16.msra.mxu0 0
    %812 = vmatprep.subr.bf16.mxu0 0
    %813 = vmatpush1.bf16.msra.mxu0 0
    %814 = vmatprep.subr.bf16.mxu0 0
    %815 = vmatpush1.bf16.msra.mxu0 0
    %816 = vmatprep.subr.bf16.mxu0 0
    %817 = vmatpush1.bf16.msra.mxu0 0
    %818 = vmatprep.subr.bf16.mxu0 0
    %819 = vmatpush1.bf16.msra.mxu0 0
    %820 = vmatprep.subr.bf16.mxu0 0
    %821 = vmatpush1.bf16.msra.mxu0 0
    %822 = vmatprep.subr.bf16.mxu0 0
    %823 = vmatpush1.bf16.msra.mxu0 0
    %824 = vmatprep.mubr.bf16.mxu0 0
    %825 = vmatmul.mubr.bf16.gmra.mrb[0].mxu0 %v721
    %v826 = vpop.f32.mrb[0].mxu0
    %v827 = vadd.f32 %v743, %v826
    %v828 = vpop.f32.mrb[0].mxu0
    %v829 = vpop.f32.mrb[0].mxu0
    %v830 = vadd.f32 %v743, %v829
    %v831 = vpop.f32.mrb[0].mxu0
    %832 = vdwg.mxu0
    %v833 = vmax.f32 %v827, 0.0
    %v834 = vmax.f32 %v830, 0.0
    %v835 = vpack.c.bf16 %v834, %v833
    %s836 = scalar_lea.vmem [#allocation2], 448
    %v837 = vld [vmem:[%s836] sm:$0xf]
    %v838 = vld [vmem:[%s836 + $0x4] sm:$0xf]
    %v839 = vld [vmem:[%s836 + $0x8] sm:$0xf]
    %v840 = vld [vmem:[%s836 + $0xc] sm:$0xf]
    %v841 = vld [vmem:[%s836 + $0x10] sm:$0xf]
    %v842 = vld [vmem:[%s836 + $0x14] sm:$0xf]
    %v843 = vld [vmem:[%s836 + $0x18] sm:$0xf]
    %v844 = vld [vmem:[%s836 + $0x1c] sm:$0xf]
    %v845 = vld [vmem:[%s836 + $0x20] sm:$0xf]
    %v846 = vld [vmem:[%s836 + $0x24] sm:$0xf]
    %v847 = vld [vmem:[%s836 + $0x28] sm:$0xf]
    %v848 = vld [vmem:[%s836 + $0x2c] sm:$0xf]
    %v849 = vld [vmem:[%s836 + $0x30] sm:$0xf]
    %v850 = vld [vmem:[%s836 + $0x34] sm:$0xf]
    %v851 = vld [vmem:[%s836 + $0x38] sm:$0xf]
    %v852 = vld [vmem:[%s836 + $0x3c] sm:$0xf]
    %v853 = vld [vmem:[%s2 + $0x7] sm:$0x1]
    %v854 = vlaneseq
    %v855 = vshrl.u32 %v854, 7
    %v856 = vsub.s32 0, %v855
    %v857 = vrot.slane %v853, %v856
    %v874 = vunpack.c.l.b16 %v837
    %v875 = vunpack.c.l.b16 %v838
    %v876 = vunpack.c.l.b16 %v839
    %v877 = vunpack.c.l.b16 %v840
    %v878 = vunpack.c.l.b16 %v841
    %v879 = vunpack.c.l.b16 %v842
    %v880 = vunpack.c.l.b16 %v843
    %v881 = vunpack.c.l.b16 %v844
    %v882 = vunpack.c.l.b16 %v845
    %v883 = vunpack.c.l.b16 %v846
    %v884 = vunpack.c.l.b16 %v847
    %v885 = vunpack.c.l.b16 %v848
    %v886 = vunpack.c.l.b16 %v849
    %v887 = vunpack.c.l.b16 %v850
    %v888 = vunpack.c.l.b16 %v851
    %v889 = vunpack.c.l.b16 %v852
    %v890 = vpack.c.b16 %v875, %v874
    %v891 = vpack.c.b16 %v877, %v876
    %v892 = vpack.c.b16 %v879, %v878
    %v893 = vpack.c.b16 %v881, %v880
    %v894 = vpack.c.b16 %v883, %v882
    %v895 = vpack.c.b16 %v885, %v884
    %v896 = vpack.c.b16 %v887, %v886
    %v897 = vpack.c.b16 %v889, %v888
    %906 = vmatprep.subr.bf16.mxu0 0
    %907 = vmatpush1.bf16.msra.mxu0 %v890
    %908 = vmatprep.subr.bf16.mxu0 0
    %909 = vmatpush1.bf16.msra.mxu0 %v891
    %910 = vmatprep.subr.bf16.mxu0 0
    %911 = vmatpush1.bf16.msra.mxu0 %v892
    %912 = vmatprep.subr.bf16.mxu0 0
    %913 = vmatpush1.bf16.msra.mxu0 %v893
    %914 = vmatprep.subr.bf16.mxu0 0
    %915 = vmatpush1.bf16.msra.mxu0 %v894
    %916 = vmatprep.subr.bf16.mxu0 0
    %917 = vmatpush1.bf16.msra.mxu0 %v895
    %918 = vmatprep.subr.bf16.mxu0 0
    %919 = vmatpush1.bf16.msra.mxu0 %v896
    %920 = vmatprep.subr.bf16.mxu0 0
    %921 = vmatpush1.bf16.msra.mxu0 %v897
    %922 = vmatprep.subr.bf16.mxu0 0
    %923 = vmatpush1.bf16.msra.mxu0 0
    %924 = vmatprep.subr.bf16.mxu0 0
    %925 = vmatpush1.bf16.msra.mxu0 0
    %926 = vmatprep.subr.bf16.mxu0 0
    %927 = vmatpush1.bf16.msra.mxu0 0
    %928 = vmatprep.subr.bf16.mxu0 0
    %929 = vmatpush1.bf16.msra.mxu0 0
    %930 = vmatprep.subr.bf16.mxu0 0
    %931 = vmatpush1.bf16.msra.mxu0 0
    %932 = vmatprep.subr.bf16.mxu0 0
    %933 = vmatpush1.bf16.msra.mxu0 0
    %934 = vmatprep.subr.bf16.mxu0 0
    %935 = vmatpush1.bf16.msra.mxu0 0
    %936 = vmatprep.subr.bf16.mxu0 0
    %937 = vmatpush1.bf16.msra.mxu0 0
    %938 = vmatprep.mubr.bf16.mxu0 0
    %939 = vmatmul.mubr.bf16.gmra.mrb[0].mxu0 %v835
    %v940 = vpop.f32.mrb[0].mxu0
    %v941 = vadd.f32 %v857, %v940
    %v942 = vpop.f32.mrb[0].mxu0
    %v943 = vpop.f32.mrb[0].mxu0
    %v944 = vadd.f32 %v857, %v943
    %v945 = vpop.f32.mrb[0].mxu0
    %946 = vdwg.mxu0
    %v947 = vmax.f32 %v941, 0.0
    %v948 = vmax.f32 %v944, 0.0
    %v949 = vpack.c.bf16 %v948, %v947
    %950 = vst [vmem:[%s4] sm:$0xff] %v947
    %951 = vst [vmem:[%s4 + $0x8] sm:$0xff] %v948
    %s952 = scalar_lea.vmem [#allocation2], 512
    %v953 = vld [vmem:[%s952] sm:$0xf]
    %v954 = vld [vmem:[%s952 + $0x4] sm:$0xf]
    %v955 = vld [vmem:[%s952 + $0x8] sm:$0xf]
    %v956 = vld [vmem:[%s952 + $0xc] sm:$0xf]
    %v957 = vld [vmem:[%s952 + $0x10] sm:$0xf]
    %v958 = vld [vmem:[%s952 + $0x14] sm:$0xf]
    %v959 = vld [vmem:[%s952 + $0x18] sm:$0xf]
    %v960 = vld [vmem:[%s952 + $0x1c] sm:$0xf]
    %v961 = vld [vmem:[%s952 + $0x20] sm:$0xf]
    %v962 = vld [vmem:[%s952 + $0x24] sm:$0xf]
    %v963 = vld [vmem:[%s952 + $0x28] sm:$0xf]
    %v964 = vld [vmem:[%s952 + $0x2c] sm:$0xf]
    %v965 = vld [vmem:[%s952 + $0x30] sm:$0xf]
    %v966 = vld [vmem:[%s952 + $0x34] sm:$0xf]
    %v967 = vld [vmem:[%s952 + $0x38] sm:$0xf]
    %v968 = vld [vmem:[%s952 + $0x3c] sm:$0xf]
    %v969 = vld [vmem:[%s2 + $0x8] sm:$0x1]
    %v970 = vlaneseq
    %v971 = vshrl.u32 %v970, 7
    %v972 = vsub.s32 0, %v971
    %v973 = vrot.slane %v969, %v972
    %v990 = vunpack.c.l.b16 %v953
    %v991 = vunpack.c.l.b16 %v954
    %v992 = vunpack.c.l.b16 %v955
    %v993 = vunpack.c.l.b16 %v956
    %v994 = vunpack.c.l.b16 %v957
    %v995 = vunpack.c.l.b16 %v958
    %v996 = vunpack.c.l.b16 %v959
    %v997 = vunpack.c.l.b16 %v960
    %v998 = vunpack.c.l.b16 %v961
    %v999 = vunpack.c.l.b16 %v962
    %v1000 = vunpack.c.l.b16 %v963
    %v1001 = vunpack.c.l.b16 %v964
    %v1002 = vunpack.c.l.b16 %v965
    %v1003 = vunpack.c.l.b16 %v966
    %v1004 = vunpack.c.l.b16 %v967
    %v1005 = vunpack.c.l.b16 %v968
    %v1006 = vpack.c.b16 %v991, %v990
    %v1007 = vpack.c.b16 %v993, %v992
    %v1008 = vpack.c.b16 %v995, %v994
    %v1009 = vpack.c.b16 %v997, %v996
    %v1010 = vpack.c.b16 %v999, %v998
    %v1011 = vpack.c.b16 %v1001, %v1000
    %v1012 = vpack.c.b16 %v1003, %v1002
    %v1013 = vpack.c.b16 %v1005, %v1004
    %1022 = vmatprep.subr.bf16.mxu0 0
    %1023 = vmatpush1.bf16.msra.mxu0 %v1006
    %1024 = vmatprep.subr.bf16.mxu0 0
    %1025 = vmatpush1.bf16.msra.mxu0 %v1007
    %1026 = vmatprep.subr.bf16.mxu0 0
    %1027 = vmatpush1.bf16.msra.mxu0 %v1008
    %1028 = vmatprep.subr.bf16.mxu0 0
    %1029 = vmatpush1.bf16.msra.mxu0 %v1009
    %1030 = vmatprep.subr.bf16.mxu0 0
    %1031 = vmatpush1.bf16.msra.mxu0 %v1010
    %1032 = vmatprep.subr.bf16.mxu0 0
    %1033 = vmatpush1.bf16.msra.mxu0 %v1011
    %1034 = vmatprep.subr.bf16.mxu0 0
    %1035 = vmatpush1.bf16.msra.mxu0 %v1012
    %1036 = vmatprep.subr.bf16.mxu0 0
    %1037 = vmatpush1.bf16.msra.mxu0 %v1013
    %1038 = vmatprep.subr.bf16.mxu0 0
    %1039 = vmatpush1.bf16.msra.mxu0 0
    %1040 = vmatprep.subr.bf16.mxu0 0
    %1041 = vmatpush1.bf16.msra.mxu0 0
    %1042 = vmatprep.subr.bf16.mxu0 0
    %1043 = vmatpush1.bf16.msra.mxu0 0
    %1044 = vmatprep.subr.bf16.mxu0 0
    %1045 = vmatpush1.bf16.msra.mxu0 0
    %1046 = vmatprep.subr.bf16.mxu0 0
    %1047 = vmatpush1.bf16.msra.mxu0 0
    %1048 = vmatprep.subr.bf16.mxu0 0
    %1049 = vmatpush1.bf16.msra.mxu0 0
    %1050 = vmatprep.subr.bf16.mxu0 0
    %1051 = vmatpush1.bf16.msra.mxu0 0
    %1052 = vmatprep.subr.bf16.mxu0 0
    %1053 = vmatpush1.bf16.msra.mxu0 0
    %1054 = vmatprep.mubr.bf16.mxu0 0
    %1055 = vmatmul.mubr.bf16.gmra.mrb[0].mxu0 %v949
    %v1056 = vpop.f32.mrb[0].mxu0
    %v1057 = vadd.f32 %v973, %v1056
    %v1058 = vpop.f32.mrb[0].mxu0
    %v1059 = vpop.f32.mrb[0].mxu0
    %v1060 = vadd.f32 %v973, %v1059
    %v1061 = vpop.f32.mrb[0].mxu0
    %1062 = vdwg.mxu0
    %1063 = vst [vmem:[%s3] sm:$0xff] %v1057
    %1064 = vst [vmem:[%s3 + $0x8] sm:$0xff] %v1060
    // Predicated region
    $region18: #{vanilla_forward.1} parent=1 // pred_check
      _
    $region19: #{vanilla_forward.1} parent=1 // pred_check_branch
      %1066 = sbr.rel (0) target = $region21
    $region20: #{vanilla_forward.1} parent=1 // pred_region
      _
    $region21: #{vanilla_forward.1} parent=1 // pred_fallthru
      _
    // Predicated region
    $region22: #{vanilla_forward.1} parent=1 // pred_check
      _
    $region23: #{vanilla_forward.1} parent=1 // pred_check_branch
      %1068 = sbr.rel (0) target = $region25
    $region24: #{vanilla_forward.1} parent=1 // pred_region
      _
    $region25: #{vanilla_forward.1} parent=1 // pred_fallthru
      _
    // Predicated region
    $region26: #{vanilla_forward.1} parent=1 // pred_check
      _
    $region27: #{vanilla_forward.1} parent=1 // pred_check_branch
      %1070 = sbr.rel (0) target = $region29
    $region28: #{vanilla_forward.1} parent=1 // pred_region
      _
    $region29: #{vanilla_forward.1} parent=1 // pred_fallthru
      _
    // Predicated region
    $region30: #{vanilla_forward.1} parent=1 // pred_check
      _
    $region31: #{vanilla_forward.1} parent=1 // pred_check_branch
      %1072 = sbr.rel (0) target = $region33
    $region32: #{vanilla_forward.1} parent=1 // pred_region
      _
    $region33: #{vanilla_forward.1} parent=1 // pred_fallthru
      _
    %1073 = vsyncpa [#allocation3], 1

</llo_original>
